<compile_context>
chip_gen: v7x
topology: tpu7x:2x2x1
jax: 0.10.0
libtpu: 0.0.40
codegen_flags: <defaults>
</compile_context>

<pallas_src>
import functools

import jax
import jax.numpy as jnp
from jax.experimental import pallas as pl
from jax.experimental.pallas import tpu as pltpu


def _supcon_tile_kernel(pq_ref, pk_ref, trow_ref, tcol_ref,
                        per_sample_ref, valid_ref,
                        *, inv_temperature, eps_add, batch_size):
    # (TQ, D) x (B, D) -> (TQ, B) NT contraction on the MXU, f32 accumulation.
    z = jax.lax.dot_general(
        pq_ref[...], pk_ref[...],
        dimension_numbers=(((1,), (1,)), ((), ())),
        preferred_element_type=jnp.float32) * inv_temperature          # (TQ, B)

    tq, b = z.shape
    row_g = pl.program_id(0) * tq + jax.lax.broadcasted_iota(jnp.int32, (tq, b), 0)
    col_g = jax.lax.broadcasted_iota(jnp.int32, (tq, b), 1)
    offdiag = row_g != col_g                                           # (TQ, B) bool
    combined = offdiag & (trow_ref[...] == tcol_ref[...])              # same class, off-diag

    # Row-wise stabilization over ALL columns (incl. diagonal), as in the reference.
    m = jnp.max(z, axis=1, keepdims=True)                              # (TQ, 1)
    e = jnp.exp(z - m)                                                 # (TQ, B)

    # denom_i = sum_{j != i} (exp(z_ij - m_i) + eps)
    denom = (jnp.sum(jnp.where(offdiag, e, 0.0), axis=1, keepdims=True)
             + eps_add * (batch_size - 1))                             # (TQ, 1)

    # sum_j combined * (-log(E/denom)) = card*log(denom) - sum_j combined*log(E)
    log_e_eps = jnp.log(e + eps_add)                                   # (TQ, B)
    card = jnp.sum(jnp.where(combined, 1.0, 0.0), axis=1, keepdims=True)
    num = (card * jnp.log(denom)
           - jnp.sum(jnp.where(combined, log_e_eps, 0.0), axis=1, keepdims=True))

    is_valid = (card != 0.0).astype(jnp.float32)                       # (TQ, 1)
    card_safe = jnp.where(card != 0.0, card, 1.0)
    # Exact (TQ,1) divide kept (negligible cost) to stay numerically close to torch.
    per_sample_ref[...] = (num / card_safe) * is_valid
    valid_ref[...] = is_valid


def supervised_contrastive_loss(projections, targets,
                                temperature=0.07, eps_add=1e-05, row_tile=None):
    """projections: [B, D] float (f32 or bf16), targets: [B] int -> scalar f32 loss."""
    B, D = projections.shape

    if row_tile is None:
        row_tile = B                      # single tile fallback (always legal)
        for cand in (512, 256, 128, 64, 32, 16, 8):
            if B % cand == 0:
                row_tile = min(cand, B)
                break
    tq = row_tile
    grid = (B // tq,)

    tgt_col = targets.reshape(B, 1).astype(jnp.int32)    # anchor side (sublane)
    tgt_row = targets.reshape(1, B).astype(jnp.int32)    # key side (lane-dense)

    # Rough VMEM need: double-buffered anchor tile + resident key copy of p
    # + ~5 f32 (TQ, B) temporaries. Only raise the limit if the default won't do.
    p_bytes = jnp.dtype(projections.dtype).itemsize
    vmem_est = (2 * tq * D + 2 * B * D) * p_bytes + 5 * tq * B * 4 + (2 << 20)
    cp_kwargs = dict(dimension_semantics=("parallel",))
    if vmem_est > 32 * 1024 * 1024:
        cp_kwargs["vmem_limit_bytes"] = int(min(vmem_est, 56 * 1024 * 1024))

    per_sample, valid = pl.pallas_call(
        functools.partial(_supcon_tile_kernel,
                          inv_temperature=float(1.0 / temperature),
                          eps_add=float(eps_add),
                          batch_size=B),
        out_shape=(jax.ShapeDtypeStruct((B, 1), jnp.float32),
                   jax.ShapeDtypeStruct((B, 1), jnp.float32)),
        grid_spec=pltpu.PrefetchScalarGridSpec(
            num_scalar_prefetch=0,
            grid=grid,
            in_specs=[
                pl.BlockSpec((tq, D), lambda i: (i, 0)),   # anchor rows (pipelined)
                pl.BlockSpec((B, D), lambda i: (0, 0)),    # full key side (resident)
                pl.BlockSpec((tq, 1), lambda i: (i, 0)),   # anchor targets (column)
                pl.BlockSpec((1, B), lambda i: (0, 0)),    # key targets (lane-dense row)
            ],
            out_specs=[
                pl.BlockSpec((tq, 1), lambda i: (i, 0)),
                pl.BlockSpec((tq, 1), lambda i: (i, 0)),
            ],
        ),
        compiler_params=pltpu.CompilerParams(**cp_kwargs),
    )(projections, projections, tgt_col, tgt_row)

    # Masked mean over valid anchors (NaN if none, matching torch.mean([])).
    return jnp.sum(per_sample) / jnp.sum(valid)


def _reference_loss(projections, targets, temperature=0.07):
    """Pure-JAX mirror of the PyTorch forward, for a sanity check."""
    p = projections.astype(jnp.float32)
    B = p.shape[0]
    dot = jnp.dot(p, p.T) / temperature
    stab = jnp.max(dot, axis=1, keepdims=True)
    E = jnp.exp(dot - stab) + 1e-05
    same = (targets[:, None] == targets[None, :]).astype(jnp.float32)
    anchor_out = 1.0 - jnp.eye(B, dtype=jnp.float32)
    comb = same * anchor_out
    card = jnp.sum(comb, axis=1)
    denom = jnp.sum(E * anchor_out, axis=1, keepdims=True)
    log_prob = -jnp.log(E / denom)
    per = jnp.sum(log_prob * comb, axis=1) / jnp.where(card != 0, card, 1.0)
    valid = (card != 0).astype(jnp.float32)
    return jnp.sum(per * valid) / jnp.sum(valid)


if __name__ == "__main__":
    key = jax.random.PRNGKey(0)
    k1, k2 = jax.random.split(key)

    B, D = 8, 32
    projections = jax.random.normal(k1, (B, D), dtype=jnp.float32)
    targets = jax.random.randint(k2, (B,), 0, 3, dtype=jnp.int32)

    loss = supervised_contrastive_loss(projections, targets)
    jax.block_until_ready(loss)

    ref = _reference_loss(projections, targets)
    lv, rv = float(loss), float(ref)
    if rv != rv:  # reference is NaN (no valid rows)
        assert lv != lv
    else:
        assert abs(lv - rv) <= 2e-3 * (1.0 + abs(rv)), (lv, rv)

    print("KERNEL_OK")
</pallas_src>

<mosaic_0001>
module attributes {stable_mosaic.version = 11 : i64} {
  func.func @_supcon_tile_kernel(%arg0: i32, %arg1: memref<8x32xf32, #tpu.memory_space<vmem>>, %arg2: memref<8x32xf32, #tpu.memory_space<vmem>>, %arg3: memref<8x1xi32, #tpu.memory_space<vmem>>, %arg4: memref<1x8xi32, #tpu.memory_space<vmem>>, %arg5: memref<8x1xf32, #tpu.memory_space<vmem>>, %arg6: memref<8x1xf32, #tpu.memory_space<vmem>>) attributes {dimension_semantics = [#tpu.dimension_semantics<parallel>], iteration_bounds = array<i64: 1>, scalar_prefetch = 0 : i64, scratch_operands = 0 : i64, tpu.core_type = #tpu.core_type<tc>, window_params = [{transform_indices = @transform_0, window_bounds = array<i64: 8, 32>}, {pipeline_mode = #tpu.pipeline_mode<synchronous>, transform_indices = @transform_1, window_bounds = array<i64: 8, 32>}, {transform_indices = @transform_2, window_bounds = array<i64: 8, 1>}, {pipeline_mode = #tpu.pipeline_mode<synchronous>, transform_indices = @transform_3, window_bounds = array<i64: 1, 8>}, {transform_indices = @transform_4, window_bounds = array<i64: 8, 1>}, {transform_indices = @transform_5, window_bounds = array<i64: 8, 1>}]} {
    %c0 = arith.constant 0 : index
    %c0_0 = arith.constant 0 : index
    %0 = vector.load %arg1[%c0, %c0_0] : memref<8x32xf32, #tpu.memory_space<vmem>>, vector<8x32xf32>
    %c0_1 = arith.constant 0 : index
    %c0_2 = arith.constant 0 : index
    %1 = vector.load %arg2[%c0_1, %c0_2] : memref<8x32xf32, #tpu.memory_space<vmem>>, vector<8x32xf32>
    %cst = arith.constant dense<0.000000e+00> : vector<8x8xf32>
    %2 = tpu.matmul %0, %1, %cst {dimension_numbers = #tpu.dot_dimension_numbers<[1], [1], [0], [0], [0, 0, 1, 0], [], []>} : vector<8x32xf32>, vector<8x32xf32>, vector<8x8xf32> -> vector<8x8xf32>
    %cst_3 = arith.constant 14.2857141 : f32
    %3 = vector.broadcast %cst_3 : f32 to vector<8x8xf32>
    %4 = arith.mulf %2, %3 : vector<8x8xf32>
    %c8_i32 = arith.constant 8 : i32
    %5 = arith.muli %arg0, %c8_i32 : i32
    %6 = tpu.iota {dimensions = array<i32: 0>} : vector<8x8xi32>
    %7 = vector.broadcast %5 : i32 to vector<8x8xi32>
    %8 = arith.addi %7, %6 : vector<8x8xi32>
    %9 = tpu.iota {dimensions = array<i32: 1>} : vector<8x8xi32>
    %10 = arith.cmpi ne, %8, %9 : vector<8x8xi32>
    %c0_4 = arith.constant 0 : index
    %c0_5 = arith.constant 0 : index
    %11 = vector.load %arg3[%c0_4, %c0_5] : memref<8x1xi32, #tpu.memory_space<vmem>>, vector<8x1xi32>
    %c0_6 = arith.constant 0 : index
    %c0_7 = arith.constant 0 : index
    %12 = vector.load %arg4[%c0_6, %c0_7] : memref<1x8xi32, #tpu.memory_space<vmem>>, vector<1x8xi32>
    %13 = vector.broadcast %11 : vector<8x1xi32> to vector<8x8xi32>
    %14 = vector.broadcast %12 : vector<1x8xi32> to vector<8x8xi32>
    %15 = arith.cmpi eq, %13, %14 : vector<8x8xi32>
    %16 = arith.andi %10, %15 : vector<8x8xi1>
    %cst_8 = arith.constant dense<0xFF800000> : vector<8xf32>
    %17 = vector.multi_reduction <maximumf>, %4, %cst_8 [1] : vector<8x8xf32> to vector<8xf32>
    %18 = vector.shape_cast %17 : vector<8xf32> to vector<8x1xf32>
    %19 = vector.broadcast %18 : vector<8x1xf32> to vector<8x8xf32>
    %20 = arith.subf %4, %19 : vector<8x8xf32>
    %21 = math.exp %20 : vector<8x8xf32>
    %cst_9 = arith.constant 0.000000e+00 : f32
    %22 = vector.broadcast %cst_9 : f32 to vector<8x8xf32>
    %23 = arith.select %10, %21, %22 : vector<8x8xi1>, vector<8x8xf32>
    %cst_10 = arith.constant dense<0.000000e+00> : vector<8xf32>
    %24 = vector.multi_reduction <add>, %23, %cst_10 [1] : vector<8x8xf32> to vector<8xf32>
    %25 = vector.shape_cast %24 : vector<8xf32> to vector<8x1xf32>
    %cst_11 = arith.constant 7.000000e-05 : f32
    %26 = vector.broadcast %cst_11 : f32 to vector<8x1xf32>
    %27 = arith.addf %25, %26 : vector<8x1xf32>
    %cst_12 = arith.constant 9.99999974E-6 : f32
    %28 = vector.broadcast %cst_12 : f32 to vector<8x8xf32>
    %29 = arith.addf %21, %28 : vector<8x8xf32>
    %30 = math.log %29 : vector<8x8xf32>
    %cst_13 = arith.constant 1.000000e+00 : f32
    %cst_14 = arith.constant 0.000000e+00 : f32
    %31 = vector.broadcast %cst_13 : f32 to vector<8x8xf32>
    %32 = vector.broadcast %cst_14 : f32 to vector<8x8xf32>
    %33 = arith.select %16, %31, %32 : vector<8x8xi1>, vector<8x8xf32>
    %cst_15 = arith.constant dense<0.000000e+00> : vector<8xf32>
    %34 = vector.multi_reduction <add>, %33, %cst_15 [1] : vector<8x8xf32> to vector<8xf32>
    %35 = vector.shape_cast %34 : vector<8xf32> to vector<8x1xf32>
    %36 = math.log %27 : vector<8x1xf32>
    %37 = arith.mulf %35, %36 : vector<8x1xf32>
    %cst_16 = arith.constant 0.000000e+00 : f32
    %38 = vector.broadcast %cst_16 : f32 to vector<8x8xf32>
    %39 = arith.select %16, %30, %38 : vector<8x8xi1>, vector<8x8xf32>
    %cst_17 = arith.constant dense<0.000000e+00> : vector<8xf32>
    %40 = vector.multi_reduction <add>, %39, %cst_17 [1] : vector<8x8xf32> to vector<8xf32>
    %41 = vector.shape_cast %40 : vector<8xf32> to vector<8x1xf32>
    %42 = arith.subf %37, %41 : vector<8x1xf32>
    %cst_18 = arith.constant 0.000000e+00 : f32
    %43 = vector.broadcast %cst_18 : f32 to vector<8x1xf32>
    %44 = arith.cmpf one, %35, %43 : vector<8x1xf32>
    %45 = arith.extui %44 : vector<8x1xi1> to vector<8x1xi32>
    %46 = arith.sitofp %45 : vector<8x1xi32> to vector<8x1xf32>
    %cst_19 = arith.constant 0.000000e+00 : f32
    %47 = vector.broadcast %cst_19 : f32 to vector<8x1xf32>
    %48 = arith.cmpf one, %35, %47 : vector<8x1xf32>
    %cst_20 = arith.constant 1.000000e+00 : f32
    %49 = vector.broadcast %cst_20 : f32 to vector<8x1xf32>
    %50 = arith.select %48, %35, %49 : vector<8x1xi1>, vector<8x1xf32>
    %51 = arith.divf %42, %50 : vector<8x1xf32>
    %52 = arith.mulf %51, %46 : vector<8x1xf32>
    %c0_21 = arith.constant 0 : index
    %c0_22 = arith.constant 0 : index
    %53 = vector.load %arg5[%c0_21, %c0_22] : memref<8x1xf32, #tpu.memory_space<vmem>>, vector<8x1xf32>
    tpu.vector_store %arg5[%c0_21, %c0_22], %52 {strides = array<i32>} : memref<8x1xf32, #tpu.memory_space<vmem>>, vector<8x1xf32>,
    %c0_23 = arith.constant 0 : index
    %c0_24 = arith.constant 0 : index
    %54 = vector.load %arg6[%c0_23, %c0_24] : memref<8x1xf32, #tpu.memory_space<vmem>>, vector<8x1xf32>
    tpu.vector_store %arg6[%c0_23, %c0_24], %46 {strides = array<i32>} : memref<8x1xf32, #tpu.memory_space<vmem>>, vector<8x1xf32>,
    return
  }
  func.func @transform_0(%arg0: i32) -> (i32, i32) {
    %c0_i32 = arith.constant 0 : i32
    %c0_i32_0 = arith.constant 0 : i32
    return %arg0, %c0_i32 : i32, i32
  }
  func.func @transform_1(%arg0: i32) -> (i32, i32) {
    %c0_i32 = arith.constant 0 : i32
    %c0_i32_0 = arith.constant 0 : i32
    %c0_i32_1 = arith.constant 0 : i32
    return %c0_i32, %c0_i32_0 : i32, i32
  }
  func.func @transform_2(%arg0: i32) -> (i32, i32) {
    %c0_i32 = arith.constant 0 : i32
    %c0_i32_0 = arith.constant 0 : i32
    return %arg0, %c0_i32 : i32, i32
  }
  func.func @transform_3(%arg0: i32) -> (i32, i32) {
    %c0_i32 = arith.constant 0 : i32
    %c0_i32_0 = arith.constant 0 : i32
    %c0_i32_1 = arith.constant 0 : i32
    return %c0_i32, %c0_i32_0 : i32, i32
  }
  func.func @transform_4(%arg0: i32) -> (i32, i32) {
    %c0_i32 = arith.constant 0 : i32
    %c0_i32_0 = arith.constant 0 : i32
    return %arg0, %c0_i32 : i32, i32
  }
  func.func @transform_5(%arg0: i32) -> (i32, i32) {
    %c0_i32 = arith.constant 0 : i32
    %c0_i32_0 = arith.constant 0 : i32
    return %arg0, %c0_i32 : i32, i32
  }
}

</mosaic_0001>

<llo_original>
// kernel: tpu_custom_call.1
$region0: #{tpu_custom_call.1}
  #allocation0 [shape = 'u32[]', space=smem, size = 0x4, offset = 0x4, fixed_abs, tag = 'smem constant byte address 0x4 - core index']
  #allocation1 [shape = 'u32[144,128]{1,0:T(1,128)}', space=vmem, size = 0x12000, scoped, tag = 'internal scratch']
  %s0 = inlined_call_operand.vmem [shape: f32[8,32], index: 0, kind: input, shape index: {}]
  %s1 = inlined_call_operand.hbm [shape: f32[8,32], index: 1, kind: input, shape index: {}]
  %s2 = inlined_call_operand.vmem [shape: s32[8,1], index: 2, kind: input, shape index: {}]
  %s3 = inlined_call_operand.vmem [shape: s32[1,8], index: 3, kind: input, shape index: {}]
  %s4 = inlined_call_operand.vmem [shape: f32[8,1], index: 4, kind: output, shape index: {0}]
  %s5 = inlined_call_operand.vmem [shape: f32[8,1], index: 5, kind: output, shape index: {1}]
  %6 = xla_tuple %s4, %s5
  %s7 = sld [smem:[#allocation0]]
  $region38: #{tpu_custom_call.1} parent=0
    _
  %s9 = ssub.s32 1, %s7
  %s10 = scalar_select 0, %s9, %s7
  $region1: #{tpu_custom_call.1} parent=0
    #allocation2 [shape = 'u8[4096]{0}', space=vmem, size = 0x1000, scoped, tag = 'input window, operand 1, single buffered']
    #allocation3 [shape = 's32[1]{0}', space=sflag, size = 0x4, scoped, tag = 'scoped memory for tpu_custom_call.1']
    %11 = vsyncpa [#allocation3], 0
    // Predicated region
    $region2: #{tpu_custom_call.1} parent=1 // pred_check
      _
    $region3: #{tpu_custom_call.1} parent=1 // pred_check_branch
      %13 = sbr.rel (0) target = $region5
    $region4: #{tpu_custom_call.1} parent=1 // pred_region
      _
    $region5: #{tpu_custom_call.1} parent=1 // pred_fallthru
      _
    // Predicated region
    $region6: #{tpu_custom_call.1} parent=1 // pred_check
      _
    $region7: #{tpu_custom_call.1} parent=1 // pred_check_branch
      %15 = sbr.rel (0) target = $region9
    $region8: #{tpu_custom_call.1} parent=1 // pred_region
      %s17 = ssub.s32 128, 128
      %18 = vsyncadd [#allocation3], %s17
      %s20 = sshll.u32 [#allocation2], 4
      %s21 = int_to_ptr.vmem [resolvable:$true] %s20
      %23 = dma.hbm_to_vmem [thread:$0]  %s1, 128, %s21, [#allocation3]
    $region9: #{tpu_custom_call.1} parent=1 // pred_fallthru
      _
    // Predicated region
    $region10: #{tpu_custom_call.1} parent=1 // pred_check
      _
    $region11: #{tpu_custom_call.1} parent=1 // pred_check_branch
      %25 = sbr.rel (0) target = $region13
    $region12: #{tpu_custom_call.1} parent=1 // pred_region
      _
    $region13: #{tpu_custom_call.1} parent=1 // pred_fallthru
      _
    // Predicated region
    $region14: #{tpu_custom_call.1} parent=1 // pred_check
      _
    $region15: #{tpu_custom_call.1} parent=1 // pred_check_branch
      %27 = sbr.rel (0) target = $region17
    $region16: #{tpu_custom_call.1} parent=1 // pred_region
      _
    $region17: #{tpu_custom_call.1} parent=1 // pred_fallthru
      _
    // Predicated region
    $region18: #{tpu_custom_call.1} parent=1 // pred_check
      _
    $region19: #{tpu_custom_call.1} parent=1 // pred_check_branch
      %29 = sbr.rel (0) target = $region21
    $region20: #{tpu_custom_call.1} parent=1 // pred_region
      %30 = dma.done [#allocation3], 128
    $region21: #{tpu_custom_call.1} parent=1 // pred_fallthru
      _
    %v31 = vld [vmem:[%s0] sm:$0xff]
    %v32 = vld [vmem:[#allocation2] sm:$0xff]
    %vm33 = vcmask 261120
    %v35 = vsel %vm33, %v31, 0
    %v38 = vsel %vm33, %v32, 0
    %40 = vmatprep.subr.mxu0 0.0
    %41 = vmatpush1.xpose.msra.mxu0 %v38
    %42 = vmatprep.subr.mxu0 0.0
    %43 = vmatpush1.xpose.msra.mxu0 0.0
    %44 = vmatprep.subr.mxu0 0.0
    %45 = vmatpush1.xpose.msra.mxu0 0.0
    %46 = vmatprep.subr.mxu0 0.0
    %47 = vmatpush1.xpose.msra.mxu0 0.0
    %48 = vmatprep.subr.mxu0 0.0
    %49 = vmatpush1.xpose.msra.mxu0 0.0
    %50 = vmatprep.subr.mxu0 0.0
    %51 = vmatpush1.xpose.msra.mxu0 0.0
    %52 = vmatprep.subr.mxu0 0.0
    %53 = vmatpush1.xpose.msra.mxu0 0.0
    %54 = vmatprep.subr.mxu0 0.0
    %55 = vmatpush1.xpose.msra.mxu0 0.0
    %56 = vmatprep.subr.mxu0 0.0
    %57 = vmatpush1.xpose.msra.mxu0 0.0
    %58 = vmatprep.subr.mxu0 0.0
    %59 = vmatpush1.xpose.msra.mxu0 0.0
    %60 = vmatprep.subr.mxu0 0.0
    %61 = vmatpush1.xpose.msra.mxu0 0.0
    %62 = vmatprep.subr.mxu0 0.0
    %63 = vmatpush1.xpose.msra.mxu0 0.0
    %64 = vmatprep.subr.mxu0 0.0
    %65 = vmatpush1.xpose.msra.mxu0 0.0
    %66 = vmatprep.subr.mxu0 0.0
    %67 = vmatpush1.xpose.msra.mxu0 0.0
    %68 = vmatprep.subr.mxu0 0.0
    %69 = vmatpush1.xpose.msra.mxu0 0.0
    %70 = vmatprep.subr.mxu0 0.0
    %71 = vmatpush1.xpose.msra.mxu0 0.0
    %72 = vmatprep.subr.mxu0 0.0
    %73 = vmatpush1.xpose.msra.mxu0 0.0
    %74 = vmatprep.subr.mxu0 0.0
    %75 = vmatpush1.xpose.msra.mxu0 0.0
    %76 = vmatprep.subr.mxu0 0.0
    %77 = vmatpush1.xpose.msra.mxu0 0.0
    %78 = vmatprep.subr.mxu0 0.0
    %79 = vmatpush1.xpose.msra.mxu0 0.0
    %80 = vmatprep.subr.mxu0 0.0
    %81 = vmatpush1.xpose.msra.mxu0 0.0
    %82 = vmatprep.subr.mxu0 0.0
    %83 = vmatpush1.xpose.msra.mxu0 0.0
    %84 = vmatprep.subr.mxu0 0.0
    %85 = vmatpush1.xpose.msra.mxu0 0.0
    %86 = vmatprep.subr.mxu0 0.0
    %87 = vmatpush1.xpose.msra.mxu0 0.0
    %88 = vmatprep.subr.mxu0 0.0
    %89 = vmatpush1.xpose.msra.mxu0 0.0
    %90 = vmatprep.subr.mxu0 0.0
    %91 = vmatpush1.xpose.msra.mxu0 0.0
    %92 = vmatprep.subr.mxu0 0.0
    %93 = vmatpush1.xpose.msra.mxu0 0.0
    %94 = vmatprep.subr.mxu0 0.0
    %95 = vmatpush1.xpose.msra.mxu0 0.0
    %96 = vmatprep.subr.mxu0 0.0
    %97 = vmatpush1.xpose.msra.mxu0 0.0
    %98 = vmatprep.subr.mxu0 0.0
    %99 = vmatpush1.xpose.msra.mxu0 0.0
    %100 = vmatprep.subr.mxu0 0.0
    %101 = vmatpush1.xpose.msra.mxu0 0.0
    %102 = vmatprep.subr.mxu0 0.0
    %103 = vmatpush1.xpose.msra.mxu0 0.0
    %104 = vmatprep.mubr.f32.mxu0 0.0
    %105 = vmatmul.mubr.f32.gmra.mrb[0].mxu0 %v35
    %v106 = vpop.f32.mrb[0].mxu0
    %v107 = vadd.f32 0.0, %v106
    %v108 = vpop.f32.mrb[0].mxu0
    %109 = vdwg.mxu0
    %v110 = vmul.f32 %v107, 14.285714
    %s111 = smul.u32 0, 8
    %v112 = vlaneseq
    %v113 = vshrl.u32 %v112, 7
    %v114 = vstv %s111
    %v115 = vadd.s32 %v114, %v113
    %v116 = vlaneseq
    %v117 = vand.u32 %v116, 127
    %vm118 = vcmp.ne.s32.totalorder %v115, %v117
    %v119 = vld [vmem:[%s2] sm:$0xff]
    %v120 = vld [vmem:[%s3] sm:$0x1]
    %121 = vset.pattern.permute.xlu0 0
    %122 = vperm.xlu0 %121, %v119
    %v123 = vpop.permute.xlu0 %122
    %v124 = vlaneseq
    %v125 = vshrl.u32 %v124, 7
    %v126 = vsub.s32 0, %v125
    %v127 = vrot.slane %v120, %v126
    %vm128 = vcmp.eq.s32.totalorder %v123, %v127
    %vm129 = vmand %vm118, %vm128
    %vm130 = vcmask 64512
    %v131 = vsel %vm130, %v110, -inf
    %132 = vmax.xlane.f32.xlu0 %v131
    %v133 = vpop.xlane.xlu0 %132
    %v134 = vsub.f32 %v110, %v133
    %v135 = vmul.f32 %v134, 1.442695
    %v136 = vpow.pop %v135
    %v137 = vsel %vm118, %v136, 0.0
    %v138 = vsel %vm130, %v137, 0.0
    %139 = vadd.xlane.f32.xlu0 %v138
    %v140 = vpop.xlane.xlu0 %139
    %v141 = vadd.f32 %v140, 7e-05
    %v142 = vadd.f32 %v136, 1e-05
    %v143 = vlog2.pop %v142
    %v144 = vmul.f32 %v143, 0.6931472
    %v145 = vsel %vm129, 1.0, 0.0
    %v146 = vsel %vm130, %v145, 0.0
    %147 = vadd.xlane.f32.xlu0 %v146
    %v148 = vpop.xlane.xlu0 %147
    %v149 = vlog2.pop %v141
    %v150 = vmul.f32 %v149, 0.6931472
    %v151 = vmul.f32 %v148, %v150
    %v152 = vsel %vm129, %v144, 0.0
    %v153 = vsel %vm130, %v152, 0.0
    %154 = vadd.xlane.f32.xlu0 %v153
    %v155 = vpop.xlane.xlu0 %154
    %v156 = vsub.f32 %v151, %v155
    %vm157 = vcmp.ne.f32.partialorder %v148, 0.0
    %v158 = vsel %vm157, 1, 0
    %v159 = vcvt.s32.f32 %v158
    %v160 = vsel %vm157, %v148, 1.0
    %v161 = vrcp.pop %v160
    %v162 = vmul.f32 %v156, %v161
    %v163 = vmul.f32 %v162, %v159
    %vm164 = vcmask 7168
    %165 = vst.msk [vmem:[%s4] sm:$0xff] %vm164, %v163
    %166 = vst.msk [vmem:[%s5] sm:$0xff] %vm164, %v159
    // Predicated region
    $region22: #{tpu_custom_call.1} parent=1 // pred_check
      _
    $region23: #{tpu_custom_call.1} parent=1 // pred_check_branch
      %168 = sbr.rel (0) target = $region25
    $region24: #{tpu_custom_call.1} parent=1 // pred_region
      _
    $region25: #{tpu_custom_call.1} parent=1 // pred_fallthru
      _
    // Predicated region
    $region26: #{tpu_custom_call.1} parent=1 // pred_check
      _
    $region27: #{tpu_custom_call.1} parent=1 // pred_check_branch
      %170 = sbr.rel (0) target = $region29
    $region28: #{tpu_custom_call.1} parent=1 // pred_region
      _
    $region29: #{tpu_custom_call.1} parent=1 // pred_fallthru
      _
    // Predicated region
    $region30: #{tpu_custom_call.1} parent=1 // pred_check
      _
    $region31: #{tpu_custom_call.1} parent=1 // pred_check_branch
      %172 = sbr.rel (0) target = $region33
    $region32: #{tpu_custom_call.1} parent=1 // pred_region
      _
    $region33: #{tpu_custom_call.1} parent=1 // pred_fallthru
      _
    // Predicated region
    $region34: #{tpu_custom_call.1} parent=1 // pred_check
      _
    $region35: #{tpu_custom_call.1} parent=1 // pred_check_branch
      %174 = sbr.rel (0) target = $region37
    $region36: #{tpu_custom_call.1} parent=1 // pred_region
      _
    $region37: #{tpu_custom_call.1} parent=1 // pred_fallthru
      _
    %175 = vsyncpa [#allocation3], 1

</llo_original>
